<compile_context>
chip_gen: v5e
topology: v5e:2x2
jax: 0.10.0
libtpu: 0.0.40
codegen_flags: <defaults>
</compile_context>

<pallas_src>
import functools
import math

import jax
import jax.numpy as jnp
from jax.experimental import pallas as pl
from jax.experimental.pallas import tpu as pltpu


_DEP_VMEM_BUDGET = 20 << 20   # double-buffered dep block budget (v7x 64 MiB VMEM safe)


def _gcn_layers(marginal, x_ref, wf_ref, bf_ref, wb_ref, bb_ref,
                out_fw_ref, out_bw_ref, use_bf16, precision):
    """Stacked bidirectional GCN layers for one batch tile.

    marginal : [Bt, N, N] f32 value (sum over relations of dep_probs)
    x_ref    : [Bt, N, 2H]
    wf_ref/wb_ref : [L, 2H, H]    bf_ref/bb_ref : [L, 1, H]
    out_fw_ref / out_bw_ref : [Bt, N, H]
    """
    num_layers, d2, h = wf_ref.shape
    bt, n, _ = x_ref.shape
    cdt = jnp.bfloat16 if use_bf16 else jnp.float32

    # Cast of the adjacency operand hoisted out of the layer loop.
    marg_c = marginal.astype(cdt)

    x2d = x_ref[...].astype(jnp.float32).reshape(bt * n, d2)
    hf = None
    hb = None
    for l in range(num_layers):                      # static unroll (gcn_layer)
        bf_l = bf_ref[l]                             # [1, H] (pre-reshaped in wrapper)
        bb_l = bb_ref[l]
        if l == 0:
            # Input is already the concatenated 2H feature -> plain projection.
            wf_l = wf_ref[l].astype(cdt)             # [2H, H]
            wb_l = wb_ref[l].astype(cdt)
            xc = x2d.astype(cdt)
            pf = jnp.dot(xc, wf_l, preferred_element_type=jnp.float32,
                         precision=precision) + bf_l
            pb = jnp.dot(xc, wb_l, preferred_element_type=jnp.float32,
                         precision=precision) + bb_l
        else:
            # concat([hf, hb], -1) @ W == hf @ W[:H] + hb @ W[H:]
            # Weights sliced at the Ref level (no value-level slicing/copies).
            wf_t = wf_ref[l, :h, :].astype(cdt)
            wf_b = wf_ref[l, h:, :].astype(cdt)
            wb_t = wb_ref[l, :h, :].astype(cdt)
            wb_b = wb_ref[l, h:, :].astype(cdt)
            hfc = hf.reshape(bt * n, h).astype(cdt)
            hbc = hb.reshape(bt * n, h).astype(cdt)
            pf = (jnp.dot(hfc, wf_t, preferred_element_type=jnp.float32, precision=precision)
                  + jnp.dot(hbc, wf_b, preferred_element_type=jnp.float32, precision=precision)
                  + bf_l)
            pb = (jnp.dot(hfc, wb_t, preferred_element_type=jnp.float32, precision=precision)
                  + jnp.dot(hbc, wb_b, preferred_element_type=jnp.float32, precision=precision)
                  + bb_l)

        pf = pf.reshape(bt, n, h)
        pb = pb.reshape(bt, n, h)

        # (marginal + I) @ p   = marginal   @ p + p
        # (marginal^T + I) @ p = marginal^T @ p + p
        # The transposed contraction is expressed in the dot dimension numbers
        # ('bji,bjk'); no explicit NxN transpose value is materialized.
        # TODO(synk): if Mosaic relayouts the transposed LHS per layer, a single
        #             pre-transposed copy would shave (L-1) relayouts; kept as a
        #             dot-level transpose for small-N lowering robustness.
        af = jnp.einsum('bij,bjk->bik', marg_c, pf.astype(cdt),
                        preferred_element_type=jnp.float32, precision=precision) + pf
        ab = jnp.einsum('bji,bjk->bik', marg_c, pb.astype(cdt),
                        preferred_element_type=jnp.float32, precision=precision) + pb
        hf = jnp.maximum(af, 0.0)
        hb = jnp.maximum(ab, 0.0)

    # Lane-dense outputs: two [Bt, N, H] slabs; the wrapper concatenates.
    out_fw_ref[...] = hf.astype(out_fw_ref.dtype)
    out_bw_ref[...] = hb.astype(out_bw_ref.dtype)


def _gcnrel_kernel_full_r(dep_ref, x_ref, wf_ref, bf_ref, wb_ref, bb_ref,
                          out_fw_ref, out_bw_ref, *, use_bf16, precision):
    # dep_ref: [Bt, R, N, N] -- one big contiguous DMA; reduce over R in-register.
    marginal = dep_ref[...].astype(jnp.float32).sum(axis=1)
    _gcn_layers(marginal, x_ref, wf_ref, bf_ref, wb_ref, bb_ref,
                out_fw_ref, out_bw_ref, use_bf16, precision)


def _gcnrel_kernel_r_tiled(dep_ref, x_ref, wf_ref, bf_ref, wb_ref, bb_ref,
                           out_fw_ref, out_bw_ref, marg_ref, *, use_bf16, precision):
    # dep_ref: [Bt, Rt, N, N]; marginal accumulated across the R grid axis.
    r = pl.program_id(1)

    @pl.when(r == 0)
    def _():
        marg_ref[...] = jnp.zeros_like(marg_ref)

    marg_ref[...] += dep_ref[...].astype(jnp.float32).sum(axis=1)

    @pl.when(r == pl.num_programs(1) - 1)
    def _():
        _gcn_layers(marg_ref[...], x_ref, wf_ref, bf_ref, wb_ref, bb_ref,
                    out_fw_ref, out_bw_ref, use_bf16, precision)


def gcnrel_forward(word_h, dep_probs, wf, bf, wb, bb, *,
                   use_bf16=True, precision=None,
                   batch_tile=None, r_tile=None, min_batch_tiles=2):
    """word_h: [B,N,2H], dep_probs: [B,R,N,N], wf/wb: [L,2H,H], bf/bb: [L,H].

    use_bf16=True  -> bf16 MXU operands with f32 accumulation (fast path).
    use_bf16=False -> f32 operands; pass precision=jax.lax.Precision.HIGHEST for
                      strict f32 matmul semantics (PyTorch-parity).
    """
    B, N, D2 = word_h.shape
    Bd, R, Nd1, Nd2 = dep_probs.shape
    L, D2w, H = wf.shape
    assert Bd == B and Nd1 == N and Nd2 == N and D2w == D2 and D2 == 2 * H

    # --- pad N to a sublane multiple (zero dep rows/cols are inert for real rows) ---
    Np = -(-N // 8) * 8
    if Np != N:
        word_h = jnp.pad(word_h, ((0, 0), (0, Np - N), (0, 0)))
        dep_probs = jnp.pad(dep_probs, ((0, 0), (0, 0), (0, Np - N), (0, Np - N)))

    # --- batch tile: >=512 MXU rows per step, VMEM-capped, >=2 tiles for v7x megacore ---
    if batch_tile is None:
        bt = max(1, -(-512 // Np))
        dep_per_b = 2 * R * Np * Np * 4
        bt = min(bt, max(1, _DEP_VMEM_BUDGET // dep_per_b))
        bt = min(bt, B)
        if B > 1 and min_batch_tiles > 1:
            bt = min(bt, max(1, -(-B // min_batch_tiles)))
        bt = max(1, bt)
    else:
        bt = max(1, min(batch_tile, B))

    # --- R tile: full R if the double-buffered block fits, else a divisor of R ---
    if r_tile is None:
        rt_cap = _DEP_VMEM_BUDGET // (2 * bt * Np * Np * 4)
        if rt_cap >= R:
            rt = R
        else:
            rt = 1
            for d in range(1, R + 1):
                if R % d == 0 and d <= rt_cap:
                    rt = d
    else:
        rt = r_tile
    assert R % rt == 0, "r_tile must divide R"

    # --- pad B to a multiple of the batch tile (robust for prime / awkward B) ---
    Bp = -(-B // bt) * bt
    if Bp != B:
        word_h = jnp.pad(word_h, ((0, Bp - B), (0, 0), (0, 0)))
        dep_probs = jnp.pad(dep_probs, ((0, Bp - B), (0, 0), (0, 0), (0, 0)))

    bf3 = bf.reshape(L, 1, H)   # pre-broadcast biases (no per-layer [None,:] in-kernel)
    bb3 = bb.reshape(L, 1, H)

    n_btiles = Bp // bt
    n_rtiles = R // rt

    if n_rtiles == 1:
        grid = (n_btiles,)
        dep_spec = pl.BlockSpec((bt, R, Np, Np), lambda b: (b, 0, 0, 0))
        x_spec = pl.BlockSpec((bt, Np, D2), lambda b: (b, 0, 0))
        w_spec = pl.BlockSpec((L, D2, H), lambda b: (0, 0, 0))
        b_spec = pl.BlockSpec((L, 1, H), lambda b: (0, 0, 0))
        o_spec = pl.BlockSpec((bt, Np, H), lambda b: (b, 0, 0))
        scratch = []
        dims = ("parallel",)
        kernel = functools.partial(_gcnrel_kernel_full_r,
                                   use_bf16=use_bf16, precision=precision)
    else:
        grid = (n_btiles, n_rtiles)
        dep_spec = pl.BlockSpec((bt, rt, Np, Np), lambda b, r: (b, r, 0, 0))
        x_spec = pl.BlockSpec((bt, Np, D2), lambda b, r: (b, 0, 0))
        w_spec = pl.BlockSpec((L, D2, H), lambda b, r: (0, 0, 0))
        b_spec = pl.BlockSpec((L, 1, H), lambda b, r: (0, 0, 0))
        o_spec = pl.BlockSpec((bt, Np, H), lambda b, r: (b, 0, 0))
        scratch = [pltpu.VMEM((bt, Np, Np), jnp.float32)]
        dims = ("parallel", "arbitrary")
        kernel = functools.partial(_gcnrel_kernel_r_tiled,
                                   use_bf16=use_bf16, precision=precision)

    # VMEM estimate -> raise the scoped limit only when the defaults would be tight.
    est = (2 * bt * rt * Np * Np                 # dep (double-buffered)
           + 2 * bt * Np * D2                    # x
           + 4 * bt * Np * H                     # two outputs
           + 2 * (2 * L * D2 * H + 2 * L * H)    # weights + biases
           + 2 * bt * Np * Np                    # marginal value (+ scratch)
           + 6 * bt * Np * max(D2, Np)           # layer intermediates (rough)
           ) * 4
    vmem_limit = None
    if est > (24 << 20):
        vmem_limit = int(min(max(int(1.25 * est) + (4 << 20), 32 << 20), 48 << 20))

    out_fw, out_bw = pl.pallas_call(
        kernel,
        out_shape=(jax.ShapeDtypeStruct((Bp, Np, H), word_h.dtype),
                   jax.ShapeDtypeStruct((Bp, Np, H), word_h.dtype)),
        grid=grid,
        in_specs=[dep_spec, x_spec, w_spec, b_spec, w_spec, b_spec],
        out_specs=(o_spec, o_spec),
        scratch_shapes=scratch,
        compiler_params=pltpu.CompilerParams(
            dimension_semantics=dims, vmem_limit_bytes=vmem_limit),
    )(dep_probs, word_h, wf, bf3, wb, bb3)

    out = jnp.concatenate([out_fw, out_bw], axis=-1)
    return out[:B, :N, :]


def reference_forward(word_h, dep_probs, wf, bf, wb, bb):
    """Plain-JAX reference mirroring the PyTorch gcn branch (eval mode)."""
    marginal = jnp.transpose(dep_probs, (0, 2, 3, 1)).sum(axis=3)     # [B,N,N]
    eye = jnp.eye(marginal.shape[1], dtype=marginal.dtype)
    a_fw = marginal + eye
    a_bw = jnp.swapaxes(marginal, 1, 2) + eye
    x = word_h
    for l in range(wf.shape[0]):
        hf = jnp.maximum(jnp.einsum('bij,bjk->bik', a_fw, x @ wf[l] + bf[l]), 0.0)
        hb = jnp.maximum(jnp.einsum('bij,bjk->bik', a_bw, x @ wb[l] + bb[l]), 0.0)
        x = jnp.concatenate([hf, hb], axis=2)
    return x


if __name__ == "__main__":
    # Small synthetic shapes consistent with the module:
    B, N, R = 2, 8, 4            # batch, seq len, num dep relations
    H = 32                       # GCN out_size (hid_size); GCN in_size = 2H
    L = 2                        # gcn_layer
    D2 = 2 * H

    key = jax.random.PRNGKey(0)
    k1, k2, k3, k4, k5, k6 = jax.random.split(key, 6)

    word_h = jax.random.normal(k1, (B, N, D2), dtype=jnp.float32)
    dep_probs = jax.random.uniform(k2, (B, R, N, N), dtype=jnp.float32)

    # GCN param init: uniform(-stdv, stdv) with stdv = 1/sqrt(out_size)
    stdv = 1.0 / math.sqrt(H)
    wf = jax.random.uniform(k3, (L, D2, H), minval=-stdv, maxval=stdv, dtype=jnp.float32)
    bf = jax.random.uniform(k4, (L, H), minval=-stdv, maxval=stdv, dtype=jnp.float32)
    wb = jax.random.uniform(k5, (L, D2, H), minval=-stdv, maxval=stdv, dtype=jnp.float32)
    bb = jax.random.uniform(k6, (L, H), minval=-stdv, maxval=stdv, dtype=jnp.float32)

    ref = reference_forward(word_h, dep_probs, wf, bf, wb, bb)

    # 1) f32 path, single full-R block per batch tile (common path): tight check.
    out_f32 = jax.block_until_ready(
        gcnrel_forward(word_h, dep_probs, wf, bf, wb, bb, use_bf16=False))
    assert out_f32.shape == (B, N, D2)
    assert jnp.allclose(out_f32, ref, atol=1e-4, rtol=1e-4), "f32 full-R mismatch"

    # 2) R-tiled accumulation path (big-R / tight-VMEM fallback): tight check.
    out_rt = jax.block_until_ready(
        gcnrel_forward(word_h, dep_probs, wf, bf, wb, bb, use_bf16=False,
                       batch_tile=2, r_tile=2))
    assert jnp.allclose(out_rt, ref, atol=1e-4, rtol=1e-4), "f32 R-tiled mismatch"

    # 3) Default fast path: bf16 MXU operands with f32 accumulation (loose check).
    out_fast = jax.block_until_ready(gcnrel_forward(word_h, dep_probs, wf, bf, wb, bb))
    err = float(jnp.max(jnp.abs(out_fast - ref)))
    scale = float(jnp.max(jnp.abs(ref)))
    assert err <= 0.08 * scale + 1e-3, f"bf16 path error too large: {err} vs scale {scale}"

    print("KERNEL_OK")
</pallas_src>

<mosaic_0001>
module attributes {stable_mosaic.version = 11 : i64} {
  func.func @_gcnrel_kernel_full_r(%arg0: i32, %arg1: memref<1x4x8x8xf32, #tpu.memory_space<vmem>>, %arg2: memref<1x8x64xf32, #tpu.memory_space<vmem>>, %arg3: memref<2x64x32xf32, #tpu.memory_space<vmem>>, %arg4: memref<2x1x32xf32, #tpu.memory_space<vmem>>, %arg5: memref<2x64x32xf32, #tpu.memory_space<vmem>>, %arg6: memref<2x1x32xf32, #tpu.memory_space<vmem>>, %arg7: memref<1x8x32xf32, #tpu.memory_space<vmem>>, %arg8: memref<1x8x32xf32, #tpu.memory_space<vmem>>) attributes {dimension_semantics = [#tpu.dimension_semantics<parallel>], iteration_bounds = array<i64: 2>, scalar_prefetch = 0 : i64, scratch_operands = 0 : i64, tpu.core_type = #tpu.core_type<tc>, window_params = [{transform_indices = @transform_0, window_bounds = array<i64: 1, 4, 8, 8>}, {transform_indices = @transform_1, window_bounds = array<i64: 1, 8, 64>}, {pipeline_mode = #tpu.pipeline_mode<synchronous>, transform_indices = @transform_2, window_bounds = array<i64: 2, 64, 32>}, {pipeline_mode = #tpu.pipeline_mode<synchronous>, transform_indices = @transform_3, window_bounds = array<i64: 2, 1, 32>}, {pipeline_mode = #tpu.pipeline_mode<synchronous>, transform_indices = @transform_4, window_bounds = array<i64: 2, 64, 32>}, {pipeline_mode = #tpu.pipeline_mode<synchronous>, transform_indices = @transform_5, window_bounds = array<i64: 2, 1, 32>}, {transform_indices = @transform_6, window_bounds = array<i64: 1, 8, 32>}, {transform_indices = @transform_7, window_bounds = array<i64: 1, 8, 32>}]} {
    %c0 = arith.constant 0 : index
    %c0_0 = arith.constant 0 : index
    %c0_1 = arith.constant 0 : index
    %c0_2 = arith.constant 0 : index
    %0 = vector.load %arg1[%c0, %c0_0, %c0_1, %c0_2] : memref<1x4x8x8xf32, #tpu.memory_space<vmem>>, vector<1x4x8x8xf32>
    %cst = arith.constant dense<0.000000e+00> : vector<1x8x8xf32>
    %1 = vector.multi_reduction <add>, %0, %cst [1] : vector<1x4x8x8xf32> to vector<1x8x8xf32>
    %c0_3 = arith.constant 0 : index
    %c0_4 = arith.constant 0 : index
    %c0_5 = arith.constant 0 : index
    %2 = vector.load %arg2[%c0_3, %c0_4, %c0_5] : memref<1x8x64xf32, #tpu.memory_space<vmem>>, vector<1x8x64xf32>
    %3 = vector.shape_cast %2 : vector<1x8x64xf32> to vector<8x64xf32>
    %c0_6 = arith.constant 0 : index
    %c0_7 = arith.constant 0 : index
    %c0_8 = arith.constant 0 : index
    %4 = vector.load %arg4[%c0_6, %c0_7, %c0_8] : memref<2x1x32xf32, #tpu.memory_space<vmem>>, vector<1x1x32xf32>
    %5 = vector.shape_cast %4 : vector<1x1x32xf32> to vector<1x32xf32>
    %c0_9 = arith.constant 0 : index
    %c0_10 = arith.constant 0 : index
    %c0_11 = arith.constant 0 : index
    %6 = vector.load %arg6[%c0_9, %c0_10, %c0_11] : memref<2x1x32xf32, #tpu.memory_space<vmem>>, vector<1x1x32xf32>
    %7 = vector.shape_cast %6 : vector<1x1x32xf32> to vector<1x32xf32>
    %c0_12 = arith.constant 0 : index
    %c0_13 = arith.constant 0 : index
    %c0_14 = arith.constant 0 : index
    %8 = vector.load %arg3[%c0_12, %c0_13, %c0_14] : memref<2x64x32xf32, #tpu.memory_space<vmem>>, vector<1x64x32xf32>
    %9 = vector.shape_cast %8 : vector<1x64x32xf32> to vector<64x32xf32>
    %c0_15 = arith.constant 0 : index
    %c0_16 = arith.constant 0 : index
    %c0_17 = arith.constant 0 : index
    %10 = vector.load %arg5[%c0_15, %c0_16, %c0_17] : memref<2x64x32xf32, #tpu.memory_space<vmem>>, vector<1x64x32xf32>
    %11 = vector.shape_cast %10 : vector<1x64x32xf32> to vector<64x32xf32>
    %cst_18 = arith.constant dense<0.000000e+00> : vector<8x32xf32>
    %12 = tpu.matmul %3, %9, %cst_18 {dimension_numbers = #tpu.dot_dimension_numbers<[1], [0], [0], [1], [0, 0, 1, 1], [], []>} : vector<8x64xf32>, vector<64x32xf32>, vector<8x32xf32> -> vector<8x32xf32>
    %13 = vector.broadcast %5 : vector<1x32xf32> to vector<8x32xf32>
    %14 = arith.addf %12, %13 : vector<8x32xf32>
    %cst_19 = arith.constant dense<0.000000e+00> : vector<8x32xf32>
    %15 = tpu.matmul %3, %11, %cst_19 {dimension_numbers = #tpu.dot_dimension_numbers<[1], [0], [0], [1], [0, 0, 1, 1], [], []>} : vector<8x64xf32>, vector<64x32xf32>, vector<8x32xf32> -> vector<8x32xf32>
    %16 = vector.broadcast %7 : vector<1x32xf32> to vector<8x32xf32>
    %17 = arith.addf %15, %16 : vector<8x32xf32>
    %18 = vector.shape_cast %14 : vector<8x32xf32> to vector<1x8x32xf32>
    %19 = vector.shape_cast %17 : vector<8x32xf32> to vector<1x8x32xf32>
    "tpu.trace_start"() <{level = 10 : i32, message = "bij,bjk->bik"}> : () -> ()
    %cst_20 = arith.constant dense<0.000000e+00> : vector<1x8x32xf32>
    %20 = tpu.matmul %1, %18, %cst_20 {dimension_numbers = #tpu.dot_dimension_numbers<[2], [1], [1], [2], [0, 0, 0, 1, 1, 2], [0], [0]>} : vector<1x8x8xf32>, vector<1x8x32xf32>, vector<1x8x32xf32> -> vector<1x8x32xf32>
    "tpu.trace_stop"() : () -> ()
    %21 = arith.addf %20, %18 : vector<1x8x32xf32>
    "tpu.trace_start"() <{level = 10 : i32, message = "bji,bjk->bik"}> : () -> ()
    %cst_21 = arith.constant dense<0.000000e+00> : vector<1x8x32xf32>
    %22 = tpu.matmul %1, %19, %cst_21 {dimension_numbers = #tpu.dot_dimension_numbers<[1], [1], [2], [2], [0, 0, 0, 2, 1, 2], [0], [0]>} : vector<1x8x8xf32>, vector<1x8x32xf32>, vector<1x8x32xf32> -> vector<1x8x32xf32>
    "tpu.trace_stop"() : () -> ()
    %23 = arith.addf %22, %19 : vector<1x8x32xf32>
    %cst_22 = arith.constant 0.000000e+00 : f32
    %24 = vector.broadcast %cst_22 : f32 to vector<1x8x32xf32>
    %25 = arith.maximumf %21, %24 : vector<1x8x32xf32>
    %cst_23 = arith.constant 0.000000e+00 : f32
    %26 = vector.broadcast %cst_23 : f32 to vector<1x8x32xf32>
    %27 = arith.maximumf %23, %26 : vector<1x8x32xf32>
    %c1 = arith.constant 1 : index
    %c0_24 = arith.constant 0 : index
    %c0_25 = arith.constant 0 : index
    %28 = vector.load %arg4[%c1, %c0_24, %c0_25] : memref<2x1x32xf32, #tpu.memory_space<vmem>>, vector<1x1x32xf32>
    %29 = vector.shape_cast %28 : vector<1x1x32xf32> to vector<1x32xf32>
    %c1_26 = arith.constant 1 : index
    %c0_27 = arith.constant 0 : index
    %c0_28 = arith.constant 0 : index
    %30 = vector.load %arg6[%c1_26, %c0_27, %c0_28] : memref<2x1x32xf32, #tpu.memory_space<vmem>>, vector<1x1x32xf32>
    %31 = vector.shape_cast %30 : vector<1x1x32xf32> to vector<1x32xf32>
    %c1_29 = arith.constant 1 : index
    %c0_30 = arith.constant 0 : index
    %c0_31 = arith.constant 0 : index
    %32 = vector.load %arg3[%c1_29, %c0_30, %c0_31] : memref<2x64x32xf32, #tpu.memory_space<vmem>>, vector<1x32x32xf32>
    %33 = vector.shape_cast %32 : vector<1x32x32xf32> to vector<32x32xf32>
    %c1_32 = arith.constant 1 : index
    %c32 = arith.constant 32 : index
    %c0_33 = arith.constant 0 : index
    %34 = vector.load %arg3[%c1_32, %c32, %c0_33] : memref<2x64x32xf32, #tpu.memory_space<vmem>>, vector<1x32x32xf32>
    %35 = vector.shape_cast %34 : vector<1x32x32xf32> to vector<32x32xf32>
    %c1_34 = arith.constant 1 : index
    %c0_35 = arith.constant 0 : index
    %c0_36 = arith.constant 0 : index
    %36 = vector.load %arg5[%c1_34, %c0_35, %c0_36] : memref<2x64x32xf32, #tpu.memory_space<vmem>>, vector<1x32x32xf32>
    %37 = vector.shape_cast %36 : vector<1x32x32xf32> to vector<32x32xf32>
    %c1_37 = arith.constant 1 : index
    %c32_38 = arith.constant 32 : index
    %c0_39 = arith.constant 0 : index
    %38 = vector.load %arg5[%c1_37, %c32_38, %c0_39] : memref<2x64x32xf32, #tpu.memory_space<vmem>>, vector<1x32x32xf32>
    %39 = vector.shape_cast %38 : vector<1x32x32xf32> to vector<32x32xf32>
    %40 = vector.shape_cast %25 : vector<1x8x32xf32> to vector<8x32xf32>
    %41 = vector.shape_cast %27 : vector<1x8x32xf32> to vector<8x32xf32>
    %cst_40 = arith.constant dense<0.000000e+00> : vector<8x32xf32>
    %42 = tpu.matmul %40, %33, %cst_40 {dimension_numbers = #tpu.dot_dimension_numbers<[1], [0], [0], [1], [0, 0, 1, 1], [], []>} : vector<8x32xf32>, vector<32x32xf32>, vector<8x32xf32> -> vector<8x32xf32>
    %cst_41 = arith.constant dense<0.000000e+00> : vector<8x32xf32>
    %43 = tpu.matmul %41, %35, %cst_41 {dimension_numbers = #tpu.dot_dimension_numbers<[1], [0], [0], [1], [0, 0, 1, 1], [], []>} : vector<8x32xf32>, vector<32x32xf32>, vector<8x32xf32> -> vector<8x32xf32>
    %44 = arith.addf %42, %43 : vector<8x32xf32>
    %45 = vector.broadcast %29 : vector<1x32xf32> to vector<8x32xf32>
    %46 = arith.addf %44, %45 : vector<8x32xf32>
    %cst_42 = arith.constant dense<0.000000e+00> : vector<8x32xf32>
    %47 = tpu.matmul %40, %37, %cst_42 {dimension_numbers = #tpu.dot_dimension_numbers<[1], [0], [0], [1], [0, 0, 1, 1], [], []>} : vector<8x32xf32>, vector<32x32xf32>, vector<8x32xf32> -> vector<8x32xf32>
    %cst_43 = arith.constant dense<0.000000e+00> : vector<8x32xf32>
    %48 = tpu.matmul %41, %39, %cst_43 {dimension_numbers = #tpu.dot_dimension_numbers<[1], [0], [0], [1], [0, 0, 1, 1], [], []>} : vector<8x32xf32>, vector<32x32xf32>, vector<8x32xf32> -> vector<8x32xf32>
    %49 = arith.addf %47, %48 : vector<8x32xf32>
    %50 = vector.broadcast %31 : vector<1x32xf32> to vector<8x32xf32>
    %51 = arith.addf %49, %50 : vector<8x32xf32>
    %52 = vector.shape_cast %46 : vector<8x32xf32> to vector<1x8x32xf32>
    %53 = vector.shape_cast %51 : vector<8x32xf32> to vector<1x8x32xf32>
    "tpu.trace_start"() <{level = 10 : i32, message = "bij,bjk->bik"}> : () -> ()
    %cst_44 = arith.constant dense<0.000000e+00> : vector<1x8x32xf32>
    %54 = tpu.matmul %1, %52, %cst_44 {dimension_numbers = #tpu.dot_dimension_numbers<[2], [1], [1], [2], [0, 0, 0, 1, 1, 2], [0], [0]>} : vector<1x8x8xf32>, vector<1x8x32xf32>, vector<1x8x32xf32> -> vector<1x8x32xf32>
    "tpu.trace_stop"() : () -> ()
    %55 = arith.addf %54, %52 : vector<1x8x32xf32>
    "tpu.trace_start"() <{level = 10 : i32, message = "bji,bjk->bik"}> : () -> ()
    %cst_45 = arith.constant dense<0.000000e+00> : vector<1x8x32xf32>
    %56 = tpu.matmul %1, %53, %cst_45 {dimension_numbers = #tpu.dot_dimension_numbers<[1], [1], [2], [2], [0, 0, 0, 2, 1, 2], [0], [0]>} : vector<1x8x8xf32>, vector<1x8x32xf32>, vector<1x8x32xf32> -> vector<1x8x32xf32>
    "tpu.trace_stop"() : () -> ()
    %57 = arith.addf %56, %53 : vector<1x8x32xf32>
    %cst_46 = arith.constant 0.000000e+00 : f32
    %58 = vector.broadcast %cst_46 : f32 to vector<1x8x32xf32>
    %59 = arith.maximumf %55, %58 : vector<1x8x32xf32>
    %cst_47 = arith.constant 0.000000e+00 : f32
    %60 = vector.broadcast %cst_47 : f32 to vector<1x8x32xf32>
    %61 = arith.maximumf %57, %60 : vector<1x8x32xf32>
    %c0_48 = arith.constant 0 : index
    %c0_49 = arith.constant 0 : index
    %c0_50 = arith.constant 0 : index
    %62 = vector.load %arg7[%c0_48, %c0_49, %c0_50] : memref<1x8x32xf32, #tpu.memory_space<vmem>>, vector<1x8x32xf32>
    tpu.vector_store %arg7[%c0_48, %c0_49, %c0_50], %59 {strides = array<i32>} : memref<1x8x32xf32, #tpu.memory_space<vmem>>, vector<1x8x32xf32>,
    %c0_51 = arith.constant 0 : index
    %c0_52 = arith.constant 0 : index
    %c0_53 = arith.constant 0 : index
    %63 = vector.load %arg8[%c0_51, %c0_52, %c0_53] : memref<1x8x32xf32, #tpu.memory_space<vmem>>, vector<1x8x32xf32>
    tpu.vector_store %arg8[%c0_51, %c0_52, %c0_53], %61 {strides = array<i32>} : memref<1x8x32xf32, #tpu.memory_space<vmem>>, vector<1x8x32xf32>,
    return
  }
  func.func @transform_0(%arg0: i32) -> (i32, i32, i32, i32) {
    %c0_i32 = arith.constant 0 : i32
    %c0_i32_0 = arith.constant 0 : i32
    %c0_i32_1 = arith.constant 0 : i32
    %c0_i32_2 = arith.constant 0 : i32
    return %arg0, %c0_i32, %c0_i32_0, %c0_i32_1 : i32, i32, i32, i32
  }
  func.func @transform_1(%arg0: i32) -> (i32, i32, i32) {
    %c0_i32 = arith.constant 0 : i32
    %c0_i32_0 = arith.constant 0 : i32
    %c0_i32_1 = arith.constant 0 : i32
    return %arg0, %c0_i32, %c0_i32_0 : i32, i32, i32
  }
  func.func @transform_2(%arg0: i32) -> (i32, i32, i32) {
    %c0_i32 = arith.constant 0 : i32
    %c0_i32_0 = arith.constant 0 : i32
    %c0_i32_1 = arith.constant 0 : i32
    %c0_i32_2 = arith.constant 0 : i32
    return %c0_i32, %c0_i32_0, %c0_i32_1 : i32, i32, i32
  }
  func.func @transform_3(%arg0: i32) -> (i32, i32, i32) {
    %c0_i32 = arith.constant 0 : i32
    %c0_i32_0 = arith.constant 0 : i32
    %c0_i32_1 = arith.constant 0 : i32
    %c0_i32_2 = arith.constant 0 : i32
    return %c0_i32, %c0_i32_0, %c0_i32_1 : i32, i32, i32
  }
  func.func @transform_4(%arg0: i32) -> (i32, i32, i32) {
    %c0_i32 = arith.constant 0 : i32
    %c0_i32_0 = arith.constant 0 : i32
    %c0_i32_1 = arith.constant 0 : i32
    %c0_i32_2 = arith.constant 0 : i32
    return %c0_i32, %c0_i32_0, %c0_i32_1 : i32, i32, i32
  }
  func.func @transform_5(%arg0: i32) -> (i32, i32, i32) {
    %c0_i32 = arith.constant 0 : i32
    %c0_i32_0 = arith.constant 0 : i32
    %c0_i32_1 = arith.constant 0 : i32
    %c0_i32_2 = arith.constant 0 : i32
    return %c0_i32, %c0_i32_0, %c0_i32_1 : i32, i32, i32
  }
  func.func @transform_6(%arg0: i32) -> (i32, i32, i32) {
    %c0_i32 = arith.constant 0 : i32
    %c0_i32_0 = arith.constant 0 : i32
    %c0_i32_1 = arith.constant 0 : i32
    return %arg0, %c0_i32, %c0_i32_0 : i32, i32, i32
  }
  func.func @transform_7(%arg0: i32) -> (i32, i32, i32) {
    %c0_i32 = arith.constant 0 : i32
    %c0_i32_0 = arith.constant 0 : i32
    %c0_i32_1 = arith.constant 0 : i32
    return %arg0, %c0_i32, %c0_i32_0 : i32, i32, i32
  }
}

</mosaic_0001>

<llo_original>
// kernel: tpu_custom_call.1
$region0: #{tpu_custom_call.1}
  #allocation0 [shape = 'u32[]', space=smem, size = 0x4, offset = 0x4, fixed_abs, tag = 'smem constant byte address 0x4 - core index']
  #allocation1 [shape = 'u32[72,128]{1,0:T(1,128)}', space=vmem, size = 0x9000, scoped, tag = 'internal scratch']
  %s0 = inlined_call_operand.vmem [shape: f32[2,4,8,8], index: 0, kind: input, shape index: {}]
  %s1 = inlined_call_operand.vmem [shape: f32[2,8,64], index: 1, kind: input, shape index: {}]
  %s2 = inlined_call_operand.vmem [shape: f32[2,64,32], index: 2, kind: input, shape index: {}]
  %s3 = inlined_call_operand.vmem [shape: f32[2,1,32], index: 3, kind: input, shape index: {}]
  %s4 = inlined_call_operand.vmem [shape: f32[2,64,32], index: 4, kind: input, shape index: {}]
  %s5 = inlined_call_operand.vmem [shape: f32[2,1,32], index: 5, kind: input, shape index: {}]
  %s6 = inlined_call_operand.hbm [shape: f32[2,8,32], index: 6, kind: output, shape index: {0}]
  %s7 = inlined_call_operand.hbm [shape: f32[2,8,32], index: 7, kind: output, shape index: {1}]
  %8 = xla_tuple %s6, %s7
  %s9 = sld [smem:[#allocation0]]
  $region65: #{tpu_custom_call.1} parent=0
    _
  %s11 = ssub.s32 1, %s9
  %s12 = scalar_select 0, %s11, %s9
  $region1: #{tpu_custom_call.1} parent=0
    #allocation2 [shape = 'u8[8192]{0}', space=vmem, size = 0x2000, scoped, tag = 'output window, operand 0']
    #allocation3 [shape = 's32[2]{0}', space=sflag, size = 0x8, scoped, tag = 'scoped memory for tpu_custom_call.1']
    #allocation4 [shape = 'u8[8192]{0}', space=vmem, size = 0x2000, scoped, tag = 'output window, operand 1']
    #allocation5 [shape = 's32[2]{0}', space=sflag, size = 0x8, scoped, tag = 'scoped memory for tpu_custom_call.1']
    %13 = vsyncpa [#allocation3], 0
    %s14 = scalar_lea.sflag [#allocation3], 1
    %15 = vsyncpa %s14, 0
    %16 = vsyncpa [#allocation5], 0
    %s17 = scalar_lea.sflag [#allocation5], 1
    %18 = vsyncpa %s17, 0
    loop: start=0, step=1, limit=4
    $region2: #{tpu_custom_call.1} parent=1 // loop_pre_header
      _
    $region3: #{tpu_custom_call.1} parent=1 // loop_header
      %s20 = sphi 0, %s24
      %p21 = scmp.ge.s32.totalorder %s20, 4
      %s30 = sphi 0, %s32
      %s33 = sphi 0, %s30
      %s34 = sphi 0, %s33
      %s50 = sphi 0, %s34
      %s56 = sphi 0, %s58
      %s59 = sphi 0, %s56
      %s60 = sphi 0, %s59
      %s76 = sphi 0, %s60
      %s80 = sphi 0, %s80
      %s82 = sphi 0, %s80
      %s83 = sphi 0, %s82
      %s97 = sphi 0, %s83
      %s101 = sphi 0, %s101
      %s103 = sphi 0, %s101
      %s104 = sphi 0, %s103
      %s118 = sphi 0, %s104
      %s122 = sphi 0, %s122
      %s124 = sphi 0, %s122
      %s125 = sphi 0, %s124
      %s139 = sphi 0, %s125
      %s143 = sphi 0, %s143
      %s145 = sphi 0, %s143
      %s146 = sphi 0, %s145
      %s160 = sphi 0, %s146
      %s166 = sphi 0, %s168
      %s169 = sphi 0, %s166
      %s170 = sphi 0, %s169
      %s186 = sphi 0, %s170
      %s192 = sphi 0, %s194
      %s195 = sphi 0, %s192
      %s196 = sphi 0, %s195
      %s212 = sphi 0, %s196
    $region4: #{tpu_custom_call.1} parent=1 // loop_header_branch
      %23 = sbr.rel (%p21) target = $region8
    $region5: #{tpu_custom_call.1} parent=1 // loop_body
      %s25 = ssub.s32 %s20, 1
      %s26 = ssub.s32 %s20, 2
      %s27 = sadd.s32 %s20, 1
      %s28 = ssub.s32 %s20, %s27
      %p29 = scmp.eq.s32.totalorder %s28, 0
      %s31 = sadd.s32 %s30, 1
      %s32 = scalar_select %p29, %s30, %s31
      %p35 = pneg %p29
      %p36 = scmp.eq.s32.totalorder %s20, 1
      %p37 = por %p35, %p36
      %p38 = scmp.ne.s32.totalorder %s30, %s33
      %p39 = scmp.eq.s32.totalorder %s20, 0
      %p40 = por %p38, %p39
      %p41 = scmp.ne.s32.totalorder %s30, %s33
      %p42 = scmp.eq.s32.totalorder %s25, 1
      %p43 = por %p41, %p42
      %p44 = scmp.ne.s32.totalorder %s33, %s34
      %p45 = scmp.eq.s32.totalorder %s25, 0
      %p46 = por %p44, %p45
      %p47 = scmp.ne.s32.totalorder %s33, %s34
      %p48 = scmp.eq.s32.totalorder %s26, 1
      %p49 = por %p47, %p48
      %p51 = scmp.ne.s32.totalorder %s34, %s50
      %p52 = scmp.eq.s32.totalorder %s26, 0
      %p53 = por %p51, %p52
      %s54 = ssub.s32 %s20, %s27
      %p55 = scmp.eq.s32.totalorder %s54, 0
      %s57 = sadd.s32 %s56, 1
      %s58 = scalar_select %p55, %s56, %s57
      %p61 = pneg %p55
      %p62 = scmp.eq.s32.totalorder %s20, 1
      %p63 = por %p61, %p62
      %p64 = scmp.ne.s32.totalorder %s56, %s59
      %p65 = scmp.eq.s32.totalorder %s20, 0
      %p66 = por %p64, %p65
      %p67 = scmp.ne.s32.totalorder %s56, %s59
      %p68 = scmp.eq.s32.totalorder %s25, 1
      %p69 = por %p67, %p68
      %p70 = scmp.ne.s32.totalorder %s59, %s60
      %p71 = scmp.eq.s32.totalorder %s25, 0
      %p72 = por %p70, %p71
      %p73 = scmp.ne.s32.totalorder %s59, %s60
      %p74 = scmp.eq.s32.totalorder %s26, 1
      %p75 = por %p73, %p74
      %p77 = scmp.ne.s32.totalorder %s60, %s76
      %p78 = scmp.eq.s32.totalorder %s26, 0
      %p79 = por %p77, %p78
      %s81 = sadd.s32 %s80, 1
      %p84 = scmp.eq.s32.totalorder %s20, 1
      %p85 = scmp.ne.s32.totalorder %s80, %s82
      %p86 = scmp.eq.s32.totalorder %s20, 0
      %p87 = por %p85, %p86
      %p88 = scmp.ne.s32.totalorder %s80, %s82
      %p89 = scmp.eq.s32.totalorder %s25, 1
      %p90 = por %p88, %p89
      %p91 = scmp.ne.s32.totalorder %s82, %s83
      %p92 = scmp.eq.s32.totalorder %s25, 0
      %p93 = por %p91, %p92
      %p94 = scmp.ne.s32.totalorder %s82, %s83
      %p95 = scmp.eq.s32.totalorder %s26, 1
      %p96 = por %p94, %p95
      %p98 = scmp.ne.s32.totalorder %s83, %s97
      %p99 = scmp.eq.s32.totalorder %s26, 0
      %p100 = por %p98, %p99
      %s102 = sadd.s32 %s101, 1
      %p105 = scmp.eq.s32.totalorder %s20, 1
      %p106 = scmp.ne.s32.totalorder %s101, %s103
      %p107 = scmp.eq.s32.totalorder %s20, 0
      %p108 = por %p106, %p107
      %p109 = scmp.ne.s32.totalorder %s101, %s103
      %p110 = scmp.eq.s32.totalorder %s25, 1
      %p111 = por %p109, %p110
      %p112 = scmp.ne.s32.totalorder %s103, %s104
      %p113 = scmp.eq.s32.totalorder %s25, 0
      %p114 = por %p112, %p113
      %p115 = scmp.ne.s32.totalorder %s103, %s104
      %p116 = scmp.eq.s32.totalorder %s26, 1
      %p117 = por %p115, %p116
      %p119 = scmp.ne.s32.totalorder %s104, %s118
      %p120 = scmp.eq.s32.totalorder %s26, 0
      %p121 = por %p119, %p120
      %s123 = sadd.s32 %s122, 1
      %p126 = scmp.eq.s32.totalorder %s20, 1
      %p127 = scmp.ne.s32.totalorder %s122, %s124
      %p128 = scmp.eq.s32.totalorder %s20, 0
      %p129 = por %p127, %p128
      %p130 = scmp.ne.s32.totalorder %s122, %s124
      %p131 = scmp.eq.s32.totalorder %s25, 1
      %p132 = por %p130, %p131
      %p133 = scmp.ne.s32.totalorder %s124, %s125
      %p134 = scmp.eq.s32.totalorder %s25, 0
      %p135 = por %p133, %p134
      %p136 = scmp.ne.s32.totalorder %s124, %s125
      %p137 = scmp.eq.s32.totalorder %s26, 1
      %p138 = por %p136, %p137
      %p140 = scmp.ne.s32.totalorder %s125, %s139
      %p141 = scmp.eq.s32.totalorder %s26, 0
      %p142 = por %p140, %p141
      %s144 = sadd.s32 %s143, 1
      %p147 = scmp.eq.s32.totalorder %s20, 1
      %p148 = scmp.ne.s32.totalorder %s143, %s145
      %p149 = scmp.eq.s32.totalorder %s20, 0
      %p150 = por %p148, %p149
      %p151 = scmp.ne.s32.totalorder %s143, %s145
      %p152 = scmp.eq.s32.totalorder %s25, 1
      %p153 = por %p151, %p152
      %p154 = scmp.ne.s32.totalorder %s145, %s146
      %p155 = scmp.eq.s32.totalorder %s25, 0
      %p156 = por %p154, %p155
      %p157 = scmp.ne.s32.totalorder %s145, %s146
      %p158 = scmp.eq.s32.totalorder %s26, 1
      %p159 = por %p157, %p158
      %p161 = scmp.ne.s32.totalorder %s146, %s160
      %p162 = scmp.eq.s32.totalorder %s26, 0
      %p163 = por %p161, %p162
      %s164 = ssub.s32 %s20, %s27
      %p165 = scmp.eq.s32.totalorder %s164, 0
      %s167 = sadd.s32 %s166, 1
      %s168 = scalar_select %p165, %s166, %s167
      %p171 = pneg %p165
      %p172 = scmp.eq.s32.totalorder %s20, 1
      %p173 = por %p171, %p172
      %p174 = scmp.ne.s32.totalorder %s166, %s169
      %p175 = scmp.eq.s32.totalorder %s20, 0
      %p176 = por %p174, %p175
      %p177 = scmp.ne.s32.totalorder %s166, %s169
      %p178 = scmp.eq.s32.totalorder %s25, 1
      %p179 = por %p177, %p178
      %p180 = scmp.ne.s32.totalorder %s169, %s170
      %p181 = scmp.eq.s32.totalorder %s25, 0
      %p182 = por %p180, %p181
      %p183 = scmp.ne.s32.totalorder %s169, %s170
      %p184 = scmp.eq.s32.totalorder %s26, 1
      %p185 = por %p183, %p184
      %p187 = scmp.ne.s32.totalorder %s170, %s186
      %p188 = scmp.eq.s32.totalorder %s26, 0
      %p189 = por %p187, %p188
      %s190 = ssub.s32 %s20, %s27
      %p191 = scmp.eq.s32.totalorder %s190, 0
      %s193 = sadd.s32 %s192, 1
      %s194 = scalar_select %p191, %s192, %s193
      %p197 = pneg %p191
      %p198 = scmp.eq.s32.totalorder %s20, 1
      %p199 = por %p197, %p198
      %p200 = scmp.ne.s32.totalorder %s192, %s195
      %p201 = scmp.eq.s32.totalorder %s20, 0
      %p202 = por %p200, %p201
      %p203 = scmp.ne.s32.totalorder %s192, %s195
      %p204 = scmp.eq.s32.totalorder %s25, 1
      %p205 = por %p203, %p204
      %p206 = scmp.ne.s32.totalorder %s195, %s196
      %p207 = scmp.eq.s32.totalorder %s25, 0
      %p208 = por %p206, %p207
      %p209 = scmp.ne.s32.totalorder %s195, %s196
      %p210 = scmp.eq.s32.totalorder %s26, 1
      %p211 = por %p209, %p210
      %p213 = scmp.ne.s32.totalorder %s196, %s212
      %p214 = scmp.eq.s32.totalorder %s26, 0
      %p215 = por %p213, %p214
      %p216 = scmp.le.s32.totalorder 1, %s20
      %p217 = scmp.lt.s32.totalorder %s20, 3
      %p218 = pnand %p216, %p217
      %p219 = pneg %p218
      // Predicated region
      $region9: #{tpu_custom_call.1} parent=5 // pred_check
        _
      $region10: #{tpu_custom_call.1} parent=5 // pred_check_branch
        %221 = sbr.rel (%p218) target = $region12
      $region11: #{tpu_custom_call.1} parent=5 // pred_region
        %s222 = ssub.s32 %s20, 1
        // Predicated region
        $region13: #{tpu_custom_call.1} parent=11 // pred_check
          %p223 = pneg %p93
        $region14: #{tpu_custom_call.1} parent=11 // pred_check_branch
          %225 = sbr.rel (%p223) target = $region16
        $region15: #{tpu_custom_call.1} parent=11 // pred_region
          _
        $region16: #{tpu_custom_call.1} parent=11 // pred_fallthru
          _
        // Predicated region
        $region17: #{tpu_custom_call.1} parent=11 // pred_check
          %p226 = pneg %p114
        $region18: #{tpu_custom_call.1} parent=11 // pred_check_branch
          %228 = sbr.rel (%p226) target = $region20
        $region19: #{tpu_custom_call.1} parent=11 // pred_region
          _
        $region20: #{tpu_custom_call.1} parent=11 // pred_fallthru
          _
        // Predicated region
        $region21: #{tpu_custom_call.1} parent=11 // pred_check
          %p229 = pneg %p135
        $region22: #{tpu_custom_call.1} parent=11 // pred_check_branch
          %231 = sbr.rel (%p229) target = $region24
        $region23: #{tpu_custom_call.1} parent=11 // pred_region
          _
        $region24: #{tpu_custom_call.1} parent=11 // pred_fallthru
          _
        // Predicated region
        $region25: #{tpu_custom_call.1} parent=11 // pred_check
          %p232 = pneg %p156
        $region26: #{tpu_custom_call.1} parent=11 // pred_check_branch
          %234 = sbr.rel (%p232) target = $region28
        $region27: #{tpu_custom_call.1} parent=11 // pred_region
          _
        $region28: #{tpu_custom_call.1} parent=11 // pred_fallthru
          _
      $region12: #{tpu_custom_call.1} parent=5 // pred_fallthru
        _
      %p235 = scmp.lt.s32.totalorder %s20, 2
      // Predicated region
      $region29: #{tpu_custom_call.1} parent=5 // pred_check
        %p236 = pneg %p235
      $region30: #{tpu_custom_call.1} parent=5 // pred_check_branch
        %238 = sbr.rel (%p236) target = $region32
      $region31: #{tpu_custom_call.1} parent=5 // pred_region
        // Predicated region
        $region33: #{tpu_custom_call.1} parent=31 // pred_check
          %p239 = pneg %p40
        $region34: #{tpu_custom_call.1} parent=31 // pred_check_branch
          %241 = sbr.rel (%p239) target = $region36
        $region35: #{tpu_custom_call.1} parent=31 // pred_region
          %p242 = scmp.lt.s32.totalorder %s20, 1
          %s243 = scalar_select %p242, %s20, 1
          %s244 = smul.addr %s243, 4
          %s245 = smul.addr %s244, 8
          %s246 = scalar_lea.vmem %s0, %s245
        $region36: #{tpu_custom_call.1} parent=31 // pred_fallthru
          _
        // Predicated region
        $region37: #{tpu_custom_call.1} parent=31 // pred_check
          %p247 = pneg %p66
        $region38: #{tpu_custom_call.1} parent=31 // pred_check_branch
          %249 = sbr.rel (%p247) target = $region40
        $region39: #{tpu_custom_call.1} parent=31 // pred_region
          %p250 = scmp.lt.s32.totalorder %s20, 1
          %s251 = scalar_select %p250, %s20, 1
          %s252 = smul.addr %s251, 8
          %s253 = scalar_lea.vmem %s1, %s252
        $region40: #{tpu_custom_call.1} parent=31 // pred_fallthru
          _
      $region32: #{tpu_custom_call.1} parent=5 // pred_fallthru
        _
      %p254 = scmp.le.s32.totalorder 1, %s20
      %p255 = scmp.lt.s32.totalorder %s20, 3
      %p256 = pnand %p254, %p255
      %p257 = pneg %p256
      // Predicated region
      $region41: #{tpu_custom_call.1} parent=5 // pred_check
        _
      $region42: #{tpu_custom_call.1} parent=5 // pred_check_branch
        %259 = sbr.rel (%p256) target = $region44
      $region43: #{tpu_custom_call.1} parent=5 // pred_region
        %s260 = ssub.s32 %s20, 1
        %p261 = scmp.lt.s32.totalorder %s25, 1
        %s262 = scalar_select %p261, %s25, 1
        %s263 = smul.addr %s262, 4
        %s264 = smul.addr %s263, 8
        %s265 = scalar_lea.vmem %s0, %s264
        %p266 = pneg %p46
        %p267 = pneg %p43
        %p268 = scmp.lt.s32.totalorder %s25, 1
        %s269 = scalar_select %p268, %s25, 1
        %s270 = smul.addr %s269, 8
        %s271 = scalar_lea.vmem %s1, %s270
        %p272 = pneg %p72
        %p273 = pneg %p69
        %p274 = pneg %p93
        %p275 = pneg %p90
        %p276 = pneg %p114
        %p277 = pneg %p111
        %p278 = pneg %p135
        %p279 = pneg %p132
        %p280 = pneg %p156
        %p281 = pneg %p153
        %p282 = pneg %p182
        %p283 = pneg %p179
        %s284 = sand.u32 %s169, 1
        %s285 = scalar_lea.sflag [#allocation3], %s284
        %s286 = sand.u32 %s169, 1
        %s287 = smul.addr %s286, 8
        %s288 = scalar_lea.vmem [#allocation2], %s287
        %p289 = pneg %p208
        %p290 = pneg %p205
        %s291 = sand.u32 %s195, 1
        %s292 = scalar_lea.sflag [#allocation5], %s291
        %s293 = sand.u32 %s195, 1
        %s294 = smul.addr %s293, 8
        %s295 = scalar_lea.vmem [#allocation4], %s294
        %p296 = scmp.lt.s32.totalorder %s25, 1
        %s297 = scalar_select %p296, %s25, 1
        %s298 = smul.addr %s297, 4
        %s299 = smul.addr %s298, 8
        %s300 = scalar_lea.vmem %s0, %s299
        %p301 = scmp.lt.s32.totalorder %s25, 1
        %s302 = scalar_select %p301, %s25, 1
        %s303 = smul.addr %s302, 8
        %s304 = scalar_lea.vmem %s1, %s303
        %v305 = vld [vmem:[%s300] sm:$0xff]
        %v306 = vld [vmem:[%s300 + $0x8] sm:$0xff]
        %v307 = vld [vmem:[%s300 + $0x10] sm:$0xff]
        %v308 = vld [vmem:[%s300 + $0x18] sm:$0xff]
        %vm309 = vcmask 64512
        %v310 = vsel %vm309, %v305, 0.0
        %v311 = vsel %vm309, %v306, 0.0
        %v312 = vadd.f32 %v310, %v311
        %v313 = vsel %vm309, %v307, 0.0
        %v314 = vadd.f32 %v312, %v313
        %v315 = vsel %vm309, %v308, 0.0
        %v316 = vadd.f32 %v314, %v315
        %v317 = vld [vmem:[%s304] sm:$0xff]
        %v318 = vld [vmem:[%s3] sm:$0x1]
        %v319 = vld [vmem:[%s5] sm:$0x1]
        %v320 = vld [vmem:[%s2] sm:$0xff]
        %v321 = vld [vmem:[%s2 + $0x8] sm:$0xff]
        %v322 = vld [vmem:[%s2 + $0x10] sm:$0xff]
        %v323 = vld [vmem:[%s2 + $0x18] sm:$0xff]
        %v324 = vld [vmem:[%s2 + $0x20] sm:$0xff]
        %v325 = vld [vmem:[%s2 + $0x28] sm:$0xff]
        %v326 = vld [vmem:[%s2 + $0x30] sm:$0xff]
        %v327 = vld [vmem:[%s2 + $0x38] sm:$0xff]
        %v328 = vld [vmem:[%s4] sm:$0xff]
        %v329 = vld [vmem:[%s4 + $0x8] sm:$0xff]
        %v330 = vld [vmem:[%s4 + $0x10] sm:$0xff]
        %v331 = vld [vmem:[%s4 + $0x18] sm:$0xff]
        %v332 = vld [vmem:[%s4 + $0x20] sm:$0xff]
        %v333 = vld [vmem:[%s4 + $0x28] sm:$0xff]
        %v334 = vld [vmem:[%s4 + $0x30] sm:$0xff]
        %v335 = vld [vmem:[%s4 + $0x38] sm:$0xff]
        %v337 = vperm.slane %v318, 0
        %vm339 = vcmask 523264
        %v341 = vsel %vm339, %v317, 0
        %343 = vmatpush.msra.mxu0 0.0
        %344 = vmatpush.msra.mxu0 0.0
        %345 = vmatpush.msra.mxu0 0.0
        %346 = vmatpush.msra.mxu0 0.0
        %347 = vmatpush.msra.mxu0 0.0
        %348 = vmatpush.msra.mxu0 0.0
        %349 = vmatpush.msra.mxu0 0.0
        %350 = vmatpush.msra.mxu0 0.0
        %351 = vmatpush.msra.mxu0 %v327
        %352 = vmatpush.msra.mxu0 %v326
        %353 = vmatpush.msra.mxu0 %v325
        %354 = vmatpush.msra.mxu0 %v324
        %355 = vmatpush.msra.mxu0 %v323
        %356 = vmatpush.msra.mxu0 %v322
        %357 = vmatpush.msra.mxu0 %v321
        %358 = vmatpush.msra.mxu0 %v320
        %359 = vmatmul.f32.gmra.mxu0 %v341
        %v360 = vpop.f32.mrf.mxu0
        %v361 = vadd.f32 %v337, %v360
        %362 = vdwg.mxu0
        %v364 = vperm.slane %v319, 0
        %366 = vmatpush.msra.mxu0 0.0
        %367 = vmatpush.msra.mxu0 0.0
        %368 = vmatpush.msra.mxu0 0.0
        %369 = vmatpush.msra.mxu0 0.0
        %370 = vmatpush.msra.mxu0 0.0
        %371 = vmatpush.msra.mxu0 0.0
        %372 = vmatpush.msra.mxu0 0.0
        %373 = vmatpush.msra.mxu0 0.0
        %374 = vmatpush.msra.mxu0 %v335
        %375 = vmatpush.msra.mxu0 %v334
        %376 = vmatpush.msra.mxu0 %v333
        %377 = vmatpush.msra.mxu0 %v332
        %378 = vmatpush.msra.mxu0 %v331
        %379 = vmatpush.msra.mxu0 %v330
        %380 = vmatpush.msra.mxu0 %v329
        %381 = vmatpush.msra.mxu0 %v328
        %382 = vmatmul.f32.gmra.mxu0 %v341
        %v383 = vpop.f32.mrf.mxu0
        %v384 = vadd.f32 %v364, %v383
        %385 = vdwg.mxu0
        %v387 = vsel %vm309, %v316, 0
        %389 = vmatpush.msra.mxu0 0.0
        %390 = vmatpush.msra.mxu0 0.0
        %391 = vmatpush.msra.mxu0 0.0
        %392 = vmatpush.msra.mxu0 0.0
        %393 = vmatpush.msra.mxu0 0.0
        %394 = vmatpush.msra.mxu0 0.0
        %395 = vmatpush.msra.mxu0 0.0
        %396 = vmatpush.msra.mxu0 0.0
        %397 = vmatpush.msra.mxu0 0.0
        %398 = vmatpush.msra.mxu0 0.0
        %399 = vmatpush.msra.mxu0 0.0
        %400 = vmatpush.msra.mxu0 0.0
        %401 = vmatpush.msra.mxu0 0.0
        %402 = vmatpush.msra.mxu0 0.0
        %403 = vmatpush.msra.mxu0 0.0
        %404 = vmatpush.msra.mxu0 %v361
        %405 = vmatmul.f32.gmra.mxu0 %v387
        %v406 = vpop.f32.mrf.mxu0
        %v407 = vadd.f32 %v361, %v406
        %408 = vdwg.mxu0
        %409 = vxpose.xlu0.b32.start [1/16] %v316, 128
        %410 = vxpose.xlu0.b32.cont [2/16] 0.0, 128
        %411 = vxpose.xlu0.b32.cont [3/16] 0.0, 128
        %412 = vxpose.xlu0.b32.cont [4/16] 0.0, 128
        %413 = vxpose.xlu0.b32.cont [5/16] 0.0, 128
        %414 = vxpose.xlu0.b32.cont [6/16] 0.0, 128
        %415 = vxpose.xlu0.b32.cont [7/16] 0.0, 128
        %416 = vxpose.xlu0.b32.cont [8/16] 0.0, 128
        %417 = vxpose.xlu0.b32.cont [9/16] 0.0, 128
        %418 = vxpose.xlu0.b32.cont [10/16] 0.0, 128
        %419 = vxpose.xlu0.b32.cont [11/16] 0.0, 128
        %420 = vxpose.xlu0.b32.cont [12/16] 0.0, 128
        %421 = vxpose.xlu0.b32.cont [13/16] 0.0, 128
        %422 = vxpose.xlu0.b32.cont [14/16] 0.0, 128
        %423 = vxpose.xlu0.b32.cont [15/16] 0.0, 128
        %424 = vxpose.xlu0.b32.end [16/16] 0.0, 128
        %v425 = vpop.trf.xlu0
        %v426 = vpop.trf.xlu0
        %v427 = vpop.trf.xlu0
        %v428 = vpop.trf.xlu0
        %v429 = vpop.trf.xlu0
        %v430 = vpop.trf.xlu0
        %v431 = vpop.trf.xlu0
        %v432 = vpop.trf.xlu0
        %v433 = vpop.trf.xlu0
        %v434 = vpop.trf.xlu0
        %v435 = vpop.trf.xlu0
        %v436 = vpop.trf.xlu0
        %v437 = vpop.trf.xlu0
        %v438 = vpop.trf.xlu0
        %v439 = vpop.trf.xlu0
        %v440 = vpop.trf.xlu0
        %v442 = vsel %vm309, %v425, 0
        %444 = vmatpush.msra.mxu0 0.0
        %445 = vmatpush.msra.mxu0 0.0
        %446 = vmatpush.msra.mxu0 0.0
        %447 = vmatpush.msra.mxu0 0.0
        %448 = vmatpush.msra.mxu0 0.0
        %449 = vmatpush.msra.mxu0 0.0
        %450 = vmatpush.msra.mxu0 0.0
        %451 = vmatpush.msra.mxu0 0.0
        %452 = vmatpush.msra.mxu0 0.0
        %453 = vmatpush.msra.mxu0 0.0
        %454 = vmatpush.msra.mxu0 0.0
        %455 = vmatpush.msra.mxu0 0.0
        %456 = vmatpush.msra.mxu0 0.0
        %457 = vmatpush.msra.mxu0 0.0
        %458 = vmatpush.msra.mxu0 0.0
        %459 = vmatpush.msra.mxu0 %v384
        %460 = vmatmul.f32.gmra.mxu0 %v442
        %v461 = vpop.f32.mrf.mxu0
        %v462 = vadd.f32 %v384, %v461
        %463 = vdwg.mxu0
        %v464 = vmax.f32 %v407, 0.0
        %v465 = vmax.f32 %v462, 0.0
        %s466 = scalar_lea.vmem %s3, 1
        %v467 = vld [vmem:[%s466] sm:$0x1]
        %s468 = scalar_lea.vmem %s5, 1
        %v469 = vld [vmem:[%s468] sm:$0x1]
        %s470 = scalar_lea.vmem %s2, 64
        %v471 = vld [vmem:[%s470] sm:$0xff]
        %v472 = vld [vmem:[%s470 + $0x8] sm:$0xff]
        %v473 = vld [vmem:[%s470 + $0x10] sm:$0xff]
        %v474 = vld [vmem:[%s470 + $0x18] sm:$0xff]
        %v475 = vld [vmem:[%s470 + $0x20] sm:$0xff]
        %v476 = vld [vmem:[%s470 + $0x28] sm:$0xff]
        %v477 = vld [vmem:[%s470 + $0x30] sm:$0xff]
        %v478 = vld [vmem:[%s470 + $0x38] sm:$0xff]
        %s479 = scalar_lea.vmem %s4, 64
        %v480 = vld [vmem:[%s479] sm:$0xff]
        %v481 = vld [vmem:[%s479 + $0x8] sm:$0xff]
        %v482 = vld [vmem:[%s479 + $0x10] sm:$0xff]
        %v483 = vld [vmem:[%s479 + $0x18] sm:$0xff]
        %v484 = vld [vmem:[%s479 + $0x20] sm:$0xff]
        %v485 = vld [vmem:[%s479 + $0x28] sm:$0xff]
        %v486 = vld [vmem:[%s479 + $0x30] sm:$0xff]
        %v487 = vld [vmem:[%s479 + $0x38] sm:$0xff]
        %vm488 = vcmask 261120
        %v490 = vsel %vm488, %v465, 0
        %492 = vmatpush.msra.mxu0 0.0
        %493 = vmatpush.msra.mxu0 0.0
        %494 = vmatpush.msra.mxu0 0.0
        %495 = vmatpush.msra.mxu0 0.0
        %496 = vmatpush.msra.mxu0 0.0
        %497 = vmatpush.msra.mxu0 0.0
        %498 = vmatpush.msra.mxu0 0.0
        %499 = vmatpush.msra.mxu0 0.0
        %500 = vmatpush.msra.mxu0 0.0
        %501 = vmatpush.msra.mxu0 0.0
        %502 = vmatpush.msra.mxu0 0.0
        %503 = vmatpush.msra.mxu0 0.0
        %504 = vmatpush.msra.mxu0 %v478
        %505 = vmatpush.msra.mxu0 %v477
        %506 = vmatpush.msra.mxu0 %v476
        %507 = vmatpush.msra.mxu0 %v475
        %508 = vmatmul.f32.gmra.mxu0 %v490
        %v509 = vpop.f32.mrf.mxu0
        %v510 = vadd.f32 0.0, %v509
        %511 = vdwg.mxu0
        %v513 = vsel %vm488, %v464, 0
        %515 = vmatpush.msra.mxu0 0.0
        %516 = vmatpush.msra.mxu0 0.0
        %517 = vmatpush.msra.mxu0 0.0
        %518 = vmatpush.msra.mxu0 0.0
        %519 = vmatpush.msra.mxu0 0.0
        %520 = vmatpush.msra.mxu0 0.0
        %521 = vmatpush.msra.mxu0 0.0
        %522 = vmatpush.msra.mxu0 0.0
        %523 = vmatpush.msra.mxu0 0.0
        %524 = vmatpush.msra.mxu0 0.0
        %525 = vmatpush.msra.mxu0 0.0
        %526 = vmatpush.msra.mxu0 0.0
        %527 = vmatpush.msra.mxu0 %v474
        %528 = vmatpush.msra.mxu0 %v473
        %529 = vmatpush.msra.mxu0 %v472
        %530 = vmatpush.msra.mxu0 %v471
        %531 = vmatmul.f32.gmra.mxu0 %v513
        %v532 = vpop.f32.mrf.mxu0
        %v533 = vadd.f32 %v510, %v532
        %534 = vdwg.mxu0
        %v536 = vperm.slane %v467, 0
        %v538 = vadd.f32 %v533, %v536
        %539 = vmatpush.msra.mxu0 0.0
        %540 = vmatpush.msra.mxu0 0.0
        %541 = vmatpush.msra.mxu0 0.0
        %542 = vmatpush.msra.mxu0 0.0
        %543 = vmatpush.msra.mxu0 0.0
        %544 = vmatpush.msra.mxu0 0.0
        %545 = vmatpush.msra.mxu0 0.0
        %546 = vmatpush.msra.mxu0 0.0
        %547 = vmatpush.msra.mxu0 0.0
        %548 = vmatpush.msra.mxu0 0.0
        %549 = vmatpush.msra.mxu0 0.0
        %550 = vmatpush.msra.mxu0 0.0
        %551 = vmatpush.msra.mxu0 %v487
        %552 = vmatpush.msra.mxu0 %v486
        %553 = vmatpush.msra.mxu0 %v485
        %554 = vmatpush.msra.mxu0 %v484
        %555 = vmatmul.f32.gmra.mxu0 %v490
        %v556 = vpop.f32.mrf.mxu0
        %v557 = vadd.f32 0.0, %v556
        %558 = vdwg.mxu0
        %559 = vmatpush.msra.mxu0 0.0
        %560 = vmatpush.msra.mxu0 0.0
        %561 = vmatpush.msra.mxu0 0.0
        %562 = vmatpush.msra.mxu0 0.0
        %563 = vmatpush.msra.mxu0 0.0
        %564 = vmatpush.msra.mxu0 0.0
        %565 = vmatpush.msra.mxu0 0.0
        %566 = vmatpush.msra.mxu0 0.0
        %567 = vmatpush.msra.mxu0 0.0
        %568 = vmatpush.msra.mxu0 0.0
        %569 = vmatpush.msra.mxu0 0.0
        %570 = vmatpush.msra.mxu0 0.0
        %571 = vmatpush.msra.mxu0 %v483
        %572 = vmatpush.msra.mxu0 %v482
        %573 = vmatpush.msra.mxu0 %v481
        %574 = vmatpush.msra.mxu0 %v480
        %575 = vmatmul.f32.gmra.mxu0 %v513
        %v576 = vpop.f32.mrf.mxu0
        %v577 = vadd.f32 %v557, %v576
        %578 = vdwg.mxu0
        %v580 = vperm.slane %v469, 0
        %v582 = vadd.f32 %v577, %v580
        %583 = vmatpush.msra.mxu0 0.0
        %584 = vmatpush.msra.mxu0 0.0
        %585 = vmatpush.msra.mxu0 0.0
        %586 = vmatpush.msra.mxu0 0.0
        %587 = vmatpush.msra.mxu0 0.0
        %588 = vmatpush.msra.mxu0 0.0
        %589 = vmatpush.msra.mxu0 0.0
        %590 = vmatpush.msra.mxu0 0.0
        %591 = vmatpush.msra.mxu0 0.0
        %592 = vmatpush.msra.mxu0 0.0
        %593 = vmatpush.msra.mxu0 0.0
        %594 = vmatpush.msra.mxu0 0.0
        %595 = vmatpush.msra.mxu0 0.0
        %596 = vmatpush.msra.mxu0 0.0
        %597 = vmatpush.msra.mxu0 0.0
        %598 = vmatpush.msra.mxu0 %v538
        %599 = vmatmul.f32.gmra.mxu0 %v387
        %v600 = vpop.f32.mrf.mxu0
        %v601 = vadd.f32 %v538, %v600
        %602 = vdwg.mxu0
        %603 = vmatpush.msra.mxu0 0.0
        %604 = vmatpush.msra.mxu0 0.0
        %605 = vmatpush.msra.mxu0 0.0
        %606 = vmatpush.msra.mxu0 0.0
        %607 = vmatpush.msra.mxu0 0.0
        %608 = vmatpush.msra.mxu0 0.0
        %609 = vmatpush.msra.mxu0 0.0
        %610 = vmatpush.msra.mxu0 0.0
        %611 = vmatpush.msra.mxu0 0.0
        %612 = vmatpush.msra.mxu0 0.0
        %613 = vmatpush.msra.mxu0 0.0
        %614 = vmatpush.msra.mxu0 0.0
        %615 = vmatpush.msra.mxu0 0.0
        %616 = vmatpush.msra.mxu0 0.0
        %617 = vmatpush.msra.mxu0 0.0
        %618 = vmatpush.msra.mxu0 %v582
        %619 = vmatmul.f32.gmra.mxu0 %v442
        %v620 = vpop.f32.mrf.mxu0
        %v621 = vadd.f32 %v582, %v620
        %622 = vdwg.mxu0
        %v623 = vmax.f32 %v601, 0.0
        %v624 = vmax.f32 %v621, 0.0
        %625 = vst.msk [vmem:[%s288] sm:$0xff] %vm488, %v623
        %626 = vst.msk [vmem:[%s295] sm:$0xff] %vm488, %v624
        %s627 = sand.u32 %s169, 1
        %s628 = scalar_lea.sflag [#allocation3], %s627
        %s629 = sand.u32 %s169, 1
        %s630 = smul.addr %s629, 8
        %s631 = scalar_lea.vmem [#allocation2], %s630
        %s632 = sand.u32 %s195, 1
        %s633 = scalar_lea.sflag [#allocation5], %s632
        %s634 = sand.u32 %s195, 1
        %s635 = smul.addr %s634, 8
        %s636 = scalar_lea.vmem [#allocation4], %s635
        // Predicated region
        $region45: #{tpu_custom_call.1} parent=43 // pred_check
          %p637 = pneg %p179
        $region46: #{tpu_custom_call.1} parent=43 // pred_check_branch
          %639 = sbr.rel (%p637) target = $region48
        $region47: #{tpu_custom_call.1} parent=43 // pred_region
          %641 = vsyncadd %s628, 0
          %s642 = smul.addr %s25, 8
          %s643 = scalar_lea.hbm %s6, %s642
          %s645 = sshll.u32 %s631, 4
          %s646 = int_to_ptr.vmem [resolvable:$true] %s645
          %s647 = sshll.u32 %s643, 4
          %s648 = int_to_ptr.hbm [resolvable:$true] %s647
          %650 = dma.vmem_to_hbm [thread:$0]  %s646, 128, %s648, %s628
        $region48: #{tpu_custom_call.1} parent=43 // pred_fallthru
          _
        // Predicated region
        $region49: #{tpu_custom_call.1} parent=43 // pred_check
          %p651 = pneg %p205
        $region50: #{tpu_custom_call.1} parent=43 // pred_check_branch
          %653 = sbr.rel (%p651) target = $region52
        $region51: #{tpu_custom_call.1} parent=43 // pred_region
          %655 = vsyncadd %s633, 0
          %s656 = smul.addr %s25, 8
          %s657 = scalar_lea.hbm %s7, %s656
          %s659 = sshll.u32 %s636, 4
          %s660 = int_to_ptr.vmem [resolvable:$true] %s659
          %s661 = sshll.u32 %s657, 4
          %s662 = int_to_ptr.hbm [resolvable:$true] %s661
          %664 = dma.vmem_to_hbm [thread:$0]  %s660, 128, %s662, %s633
        $region52: #{tpu_custom_call.1} parent=43 // pred_fallthru
          _
      $region44: #{tpu_custom_call.1} parent=5 // pred_fallthru
        _
      %p665 = scmp.le.s32.totalorder 2, %s20
      // Predicated region
      $region53: #{tpu_custom_call.1} parent=5 // pred_check
        %p666 = pneg %p665
      $region54: #{tpu_custom_call.1} parent=5 // pred_check_branch
        %668 = sbr.rel (%p666) target = $region56
      $region55: #{tpu_custom_call.1} parent=5 // pred_region
        %s669 = ssub.s32 %s20, 2
        // Predicated region
        $region57: #{tpu_custom_call.1} parent=55 // pred_check
          %p670 = pneg %p185
        $region58: #{tpu_custom_call.1} parent=55 // pred_check_branch
          %672 = sbr.rel (%p670) target = $region60
        $region59: #{tpu_custom_call.1} parent=55 // pred_region
          %s673 = sand.u32 %s170, 1
          %s674 = scalar_lea.sflag [#allocation3], %s673
          %s675 = sand.u32 %s170, 1
          %s676 = smul.addr %s675, 8
          %s677 = scalar_lea.vmem [#allocation2], %s676
          %679 = dma.done %s674, 128
        $region60: #{tpu_custom_call.1} parent=55 // pred_fallthru
          _
        // Predicated region
        $region61: #{tpu_custom_call.1} parent=55 // pred_check
          %p680 = pneg %p211
        $region62: #{tpu_custom_call.1} parent=55 // pred_check_branch
          %682 = sbr.rel (%p680) target = $region64
        $region63: #{tpu_custom_call.1} parent=55 // pred_region
          %s683 = sand.u32 %s196, 1
          %s684 = scalar_lea.sflag [#allocation5], %s683
          %s685 = sand.u32 %s196, 1
          %s686 = smul.addr %s685, 8
          %s687 = scalar_lea.vmem [#allocation4], %s686
          %689 = dma.done %s684, 128
        $region64: #{tpu_custom_call.1} parent=55 // pred_fallthru
          _
      $region56: #{tpu_custom_call.1} parent=5 // pred_fallthru
        _
    $region6: #{tpu_custom_call.1} parent=1 // loop_footer
      %s24 = sadd.s32 1, %s20
    $region7: #{tpu_custom_call.1} parent=1 // loop_footer_branch
      %19 = sbr.rel target = $region3
    $region8: #{tpu_custom_call.1} parent=1 // loop_exit
      _
    %690 = vsyncpa [#allocation3], 1
    %s691 = scalar_lea.sflag [#allocation3], 1
    %692 = vsyncpa %s691, 1
    %693 = vsyncpa [#allocation5], 1
    %s694 = scalar_lea.sflag [#allocation5], 1
    %695 = vsyncpa %s694, 1

</llo_original>
